<compile_context>
chip_gen: v7x
topology: tpu7x:2x2x1
jax: 0.10.0
libtpu: 0.0.40
codegen_flags: <defaults>
</compile_context>

<pallas_src>
import jax
import jax.numpy as jnp
from jax import lax
from jax.experimental import pallas as pl
from jax.experimental.pallas import tpu as pltpu

HIDDEN = 50          # logical hidden width (nn.Linear(input_dim, 50))
HIDDEN_PAD = 128     # lane-dense padded hidden width used inside the kernel
OUT_DIM = 2          # (mean, std)


def _round_up(v, m):
    return (v + m - 1) // m * m


def pu_fc_kernel(x_ref, w1_ref, b1_ref, w2_ref, b2_ref, o_ref):
    # One (tb, D) batch tile per grid step; weights/biases are VMEM-resident.
    x = x_ref[...]                                                   # (tb, D)
    h = jnp.dot(x, w1_ref[...], preferred_element_type=jnp.float32)  # (tb, Hp)
    h = jnp.maximum(h + b1_ref[...], 0.0)                            # ReLU

    # fc2, transposed: contract the lane-dense hidden dim of w2 (2, Hp) with
    # the hidden dim of h (tb, Hp) -> MXU emits a (2, tb) tile directly.
    out_t = lax.dot_general(
        w2_ref[...], h,
        dimension_numbers=(((1,), (1,)), ((), ())),
        preferred_element_type=jnp.float32)                          # (2, tb)
    out_t = out_t + b2_ref[...]                                      # b2: (2, 1)

    # Row 0 = mean (stored as-is); row 1 = std, exponentiated (EUP slot).
    # Lanes past B in a partial final block may exp() garbage -> harmless,
    # those lanes are dropped by the output DMA.
    o_ref[0:1, :] = out_t[0:1, :].astype(o_ref.dtype)
    o_ref[1:2, :] = jnp.exp(out_t[1:2, :]).astype(o_ref.dtype)


def pad_params(w1, b1, w2, b2, hidden_pad=HIDDEN_PAD):
    """Zero-pad the hidden dim once (wrapper/init time).  Exact: padded fc1
    columns produce relu(0) = 0 and the matching fc2 columns are zero.

    Layouts handed to the kernel:
      w1p: (D, Hp)        -- fc1 weight, transposed from PyTorch (out, in)
      b1p: (1, Hp)
      w2p: (OUT_DIM, Hp)  -- fc2 weight kept in PyTorch (out, in) layout
      b2p: (OUT_DIM, 1)
    """
    d, h = w1.shape
    assert w2.shape == (h, OUT_DIM)
    w1p = jnp.zeros((d, hidden_pad), jnp.float32).at[:, :h].set(w1)
    b1p = jnp.zeros((1, hidden_pad), jnp.float32).at[:, :h].set(b1.reshape(1, h))
    w2p = jnp.zeros((OUT_DIM, hidden_pad), jnp.float32).at[:, :h].set(w2.T)
    b2p = b2.reshape(OUT_DIM, 1).astype(jnp.float32)
    return w1p, b1p, w2p, b2p


def _choose_tb(batch, input_dim, *, budget_bytes=2 * 1024 * 1024):
    """Batch-tile rows: sized by a per-buffer byte budget (x pads to 128
    lanes in VMEM), multiple of 128 so the transposed (2, tb) output store is
    lane-dense, split into >= 2 grid steps (v7x megacore) when B is large."""
    bytes_per_row = 4 * _round_up(input_dim, 128)         # f32, lane padding
    budget_rows = max(128, (budget_bytes // bytes_per_row) // 128 * 128)
    if batch <= 256:
        return batch                                       # single tiny block
    if batch <= budget_rows:
        return min(budget_rows, _round_up(pl.cdiv(batch, 2), 128))
    return budget_rows


def pu_fc_forward(x, w1p, b1p, w2p, b2p, *, transpose_output=True):
    """x: (B, D) f32; padded params from pad_params().

    Returns (B, 2) f32 (PyTorch layout) when transpose_output=True, else the
    kernel-native lane-dense (2, B)."""
    B, D = x.shape
    Hp = w1p.shape[1]
    tb = _choose_tb(B, D)
    grid = (pl.cdiv(B, tb),)

    # Advisory cost: two tiny matmuls + one exp per row; bytes dominated by x.
    flops = 2 * B * (D * HIDDEN + HIDDEN * OUT_DIM)
    bytes_accessed = 4 * (B * D + OUT_DIM * B
                          + D * Hp + Hp + OUT_DIM * Hp + OUT_DIM)

    out_t = pl.pallas_call(
        pu_fc_kernel,
        out_shape=jax.ShapeDtypeStruct((OUT_DIM, B), jnp.float32),
        grid_spec=pl.GridSpec(
            grid=grid,
            in_specs=[
                pl.BlockSpec((tb, D), lambda i: (i, 0)),          # x: batch-tiled
                pl.BlockSpec((D, Hp), lambda i: (0, 0)),          # w1: resident
                pl.BlockSpec((1, Hp), lambda i: (0, 0)),          # b1: resident
                pl.BlockSpec((OUT_DIM, Hp), lambda i: (0, 0)),    # w2: resident
                pl.BlockSpec((OUT_DIM, 1), lambda i: (0, 0)),     # b2: resident
            ],
            out_specs=pl.BlockSpec((OUT_DIM, tb), lambda i: (0, i)),
        ),
        compiler_params=pltpu.CompilerParams(
            dimension_semantics=("parallel",),
            vmem_limit_bytes=32 * 1024 * 1024,
        ),
        cost_estimate=pl.CostEstimate(
            flops=flops, transcendentals=B, bytes_accessed=bytes_accessed),
    )(x, w1p, b1p, w2p, b2p)

    return out_t.T if transpose_output else out_t


def init_params(key, input_dim, hidden=HIDDEN, out_dim=OUT_DIM):
    """Deterministic init mimicking nn.Linear default U(-1/sqrt(fan_in), +)."""
    k1, k2, k3, k4 = jax.random.split(key, 4)
    bound1 = 1.0 / jnp.sqrt(jnp.float32(input_dim))
    bound2 = 1.0 / jnp.sqrt(jnp.float32(hidden))
    # stored as (in, out) == transposed PyTorch weight
    w1 = jax.random.uniform(k1, (input_dim, hidden), jnp.float32, -bound1, bound1)
    b1 = jax.random.uniform(k2, (1, hidden), jnp.float32, -bound1, bound1)
    w2 = jax.random.uniform(k3, (hidden, out_dim), jnp.float32, -bound2, bound2)
    b2 = jax.random.uniform(k4, (1, out_dim), jnp.float32, -bound2, bound2)
    # TODO(synk): module also has an unused `self.bias = nn.Parameter(torch.rand(1,1))`
    # and a custom_NLL loss; neither participates in forward(), so not implemented.
    return w1, b1, w2, b2


def reference_forward(x, w1, b1, w2, b2):
    h = jnp.maximum(x @ w1 + b1, 0.0)
    out = h @ w2 + b2
    return out.at[:, 1].set(jnp.exp(out[:, 1]))


if __name__ == "__main__":
    key = jax.random.PRNGKey(0)
    k_param, k_x = jax.random.split(key)

    batch, input_dim = 8, 32
    w1, b1, w2, b2 = init_params(k_param, input_dim)
    x = jax.random.normal(k_x, (batch, input_dim), jnp.float32)

    # Pad / re-layout parameters once, outside the hot path.
    w1p, b1p, w2p, b2p = pad_params(w1, b1, w2, b2)

    out = pu_fc_forward(x, w1p, b1p, w2p, b2p)
    out = jax.block_until_ready(out)

    ref = reference_forward(x, w1, b1, w2, b2)
    assert out.shape == (batch, 2)
    assert jnp.allclose(out, ref, atol=1e-5, rtol=1e-5), "mismatch vs reference"

    print("KERNEL_OK")
</pallas_src>

<mosaic_0001>
module attributes {stable_mosaic.version = 11 : i64} {
  func.func @pu_fc_kernel(%arg0: i32, %arg1: memref<8x32xf32, #tpu.memory_space<vmem>>, %arg2: memref<32x128xf32, #tpu.memory_space<vmem>>, %arg3: memref<1x128xf32, #tpu.memory_space<vmem>>, %arg4: memref<2x128xf32, #tpu.memory_space<vmem>>, %arg5: memref<2x1xf32, #tpu.memory_space<vmem>>, %arg6: memref<2x8xf32, #tpu.memory_space<vmem>>) attributes {dimension_semantics = [#tpu.dimension_semantics<parallel>], iteration_bounds = array<i64: 1>, scalar_prefetch = 0 : i64, scratch_operands = 0 : i64, tpu.core_type = #tpu.core_type<tc>, window_params = [{transform_indices = @transform_0, window_bounds = array<i64: 8, 32>}, {pipeline_mode = #tpu.pipeline_mode<synchronous>, transform_indices = @transform_1, window_bounds = array<i64: 32, 128>}, {pipeline_mode = #tpu.pipeline_mode<synchronous>, transform_indices = @transform_2, window_bounds = array<i64: 1, 128>}, {pipeline_mode = #tpu.pipeline_mode<synchronous>, transform_indices = @transform_3, window_bounds = array<i64: 2, 128>}, {pipeline_mode = #tpu.pipeline_mode<synchronous>, transform_indices = @transform_4, window_bounds = array<i64: 2, 1>}, {transform_indices = @transform_5, window_bounds = array<i64: 2, 8>}]} {
    %c0 = arith.constant 0 : index
    %c0_0 = arith.constant 0 : index
    %0 = vector.load %arg1[%c0, %c0_0] : memref<8x32xf32, #tpu.memory_space<vmem>>, vector<8x32xf32>
    %c0_1 = arith.constant 0 : index
    %c0_2 = arith.constant 0 : index
    %1 = vector.load %arg2[%c0_1, %c0_2] : memref<32x128xf32, #tpu.memory_space<vmem>>, vector<32x128xf32>
    %cst = arith.constant dense<0.000000e+00> : vector<8x128xf32>
    %2 = tpu.matmul %0, %1, %cst {dimension_numbers = #tpu.dot_dimension_numbers<[1], [0], [0], [1], [0, 0, 1, 1], [], []>} : vector<8x32xf32>, vector<32x128xf32>, vector<8x128xf32> -> vector<8x128xf32>
    %c0_3 = arith.constant 0 : index
    %c0_4 = arith.constant 0 : index
    %3 = vector.load %arg3[%c0_3, %c0_4] : memref<1x128xf32, #tpu.memory_space<vmem>>, vector<1x128xf32>
    %4 = vector.broadcast %3 : vector<1x128xf32> to vector<8x128xf32>
    %5 = arith.addf %2, %4 : vector<8x128xf32>
    %cst_5 = arith.constant 0.000000e+00 : f32
    %6 = vector.broadcast %cst_5 : f32 to vector<8x128xf32>
    %7 = arith.maximumf %5, %6 : vector<8x128xf32>
    %c0_6 = arith.constant 0 : index
    %c0_7 = arith.constant 0 : index
    %8 = vector.load %arg4[%c0_6, %c0_7] : memref<2x128xf32, #tpu.memory_space<vmem>>, vector<2x128xf32>
    %cst_8 = arith.constant dense<0.000000e+00> : vector<2x8xf32>
    %9 = tpu.matmul %8, %7, %cst_8 {dimension_numbers = #tpu.dot_dimension_numbers<[1], [1], [0], [0], [0, 0, 1, 0], [], []>} : vector<2x128xf32>, vector<8x128xf32>, vector<2x8xf32> -> vector<2x8xf32>
    %c0_9 = arith.constant 0 : index
    %c0_10 = arith.constant 0 : index
    %10 = vector.load %arg5[%c0_9, %c0_10] : memref<2x1xf32, #tpu.memory_space<vmem>>, vector<2x1xf32>
    %11 = vector.broadcast %10 : vector<2x1xf32> to vector<2x8xf32>
    %12 = arith.addf %9, %11 : vector<2x8xf32>
    %13 = vector.extract_strided_slice %12 {offsets = [0, 0], sizes = [1, 8], strides = [1, 1]} : vector<2x8xf32> to vector<1x8xf32>
    %c0_11 = arith.constant 0 : index
    %c0_12 = arith.constant 0 : index
    %14 = vector.load %arg6[%c0_11, %c0_12] : memref<2x8xf32, #tpu.memory_space<vmem>>, vector<1x8xf32>
    tpu.vector_store %arg6[%c0_11, %c0_12], %13 {strides = array<i32>} : memref<2x8xf32, #tpu.memory_space<vmem>>, vector<1x8xf32>,
    %15 = vector.extract_strided_slice %12 {offsets = [1, 0], sizes = [1, 8], strides = [1, 1]} : vector<2x8xf32> to vector<1x8xf32>
    %16 = math.exp %15 : vector<1x8xf32>
    %c1 = arith.constant 1 : index
    %c0_13 = arith.constant 0 : index
    %17 = vector.load %arg6[%c1, %c0_13] : memref<2x8xf32, #tpu.memory_space<vmem>>, vector<1x8xf32>
    tpu.vector_store %arg6[%c1, %c0_13], %16 {strides = array<i32>} : memref<2x8xf32, #tpu.memory_space<vmem>>, vector<1x8xf32>,
    return
  }
  func.func @transform_0(%arg0: i32) -> (i32, i32) {
    %c0_i32 = arith.constant 0 : i32
    %c0_i32_0 = arith.constant 0 : i32
    return %arg0, %c0_i32 : i32, i32
  }
  func.func @transform_1(%arg0: i32) -> (i32, i32) {
    %c0_i32 = arith.constant 0 : i32
    %c0_i32_0 = arith.constant 0 : i32
    %c0_i32_1 = arith.constant 0 : i32
    return %c0_i32, %c0_i32_0 : i32, i32
  }
  func.func @transform_2(%arg0: i32) -> (i32, i32) {
    %c0_i32 = arith.constant 0 : i32
    %c0_i32_0 = arith.constant 0 : i32
    %c0_i32_1 = arith.constant 0 : i32
    return %c0_i32, %c0_i32_0 : i32, i32
  }
  func.func @transform_3(%arg0: i32) -> (i32, i32) {
    %c0_i32 = arith.constant 0 : i32
    %c0_i32_0 = arith.constant 0 : i32
    %c0_i32_1 = arith.constant 0 : i32
    return %c0_i32, %c0_i32_0 : i32, i32
  }
  func.func @transform_4(%arg0: i32) -> (i32, i32) {
    %c0_i32 = arith.constant 0 : i32
    %c0_i32_0 = arith.constant 0 : i32
    %c0_i32_1 = arith.constant 0 : i32
    return %c0_i32, %c0_i32_0 : i32, i32
  }
  func.func @transform_5(%arg0: i32) -> (i32, i32) {
    %c0_i32 = arith.constant 0 : i32
    %c0_i32_0 = arith.constant 0 : i32
    return %c0_i32, %arg0 : i32, i32
  }
}

</mosaic_0001>

<llo_original>
// kernel: tpu_custom_call.1
$region0: #{tpu_custom_call.1}
  #allocation0 [shape = 'u32[]', space=smem, size = 0x4, offset = 0x4, fixed_abs, tag = 'smem constant byte address 0x4 - core index']
  #allocation1 [shape = 'u32[144,128]{1,0:T(1,128)}', space=vmem, size = 0x12000, scoped, tag = 'internal scratch']
  %s0 = inlined_call_operand.hbm [shape: f32[8,32], index: 0, kind: input, shape index: {}]
  %s1 = inlined_call_operand.hbm [shape: f32[32,128], index: 1, kind: input, shape index: {}]
  %s2 = inlined_call_operand.vmem [shape: f32[1,128], index: 2, kind: input, shape index: {}]
  %s3 = inlined_call_operand.vmem [shape: f32[2,128], index: 3, kind: input, shape index: {}]
  %s4 = inlined_call_operand.vmem [shape: f32[2,1], index: 4, kind: input, shape index: {}]
  %s5 = inlined_call_operand.hbm [shape: f32[2,8], index: 5, kind: output, shape index: {}]
  %s6 = sld [smem:[#allocation0]]
  $region38: #{tpu_custom_call.1} parent=0
    _
  %s8 = ssub.s32 1, %s6
  %s9 = scalar_select 0, %s8, %s6
  $region1: #{tpu_custom_call.1} parent=0
    #allocation2 [shape = 'u8[4096]{0}', space=vmem, size = 0x1000, scoped, tag = 'input window, operand 0, single buffered']
    #allocation3 [shape = 's32[1]{0}', space=sflag, size = 0x4, scoped, tag = 'scoped memory for tpu_custom_call.1']
    #allocation4 [shape = 's32[1]{0}', space=sflag, size = 0x4, scoped, tag = 'scoped memory for tpu_custom_call.1']
    #allocation5 [shape = 'u8[16384]{0}', space=vmem, size = 0x4000, scoped, tag = 'input window, operand 1, single buffered']
    #allocation6 [shape = 's32[1]{0}', space=sflag, size = 0x4, scoped, tag = 'scoped memory for tpu_custom_call.1']
    #allocation7 [shape = 'u8[1024]{0}', space=vmem, size = 0x400, scoped, tag = 'output window, operand 0, single buffered']
    %10 = vsyncpa [#allocation3], 0
    %11 = vsyncpa [#allocation6], 0
    %12 = vsyncpa [#allocation4], 0
    // Predicated region
    $region2: #{tpu_custom_call.1} parent=1 // pred_check
      _
    $region3: #{tpu_custom_call.1} parent=1 // pred_check_branch
      %14 = sbr.rel (0) target = $region5
    $region4: #{tpu_custom_call.1} parent=1 // pred_region
      %s16 = ssub.s32 128, 128
      %17 = vsyncadd [#allocation3], %s16
      %s19 = sshll.u32 [#allocation2], 4
      %s20 = int_to_ptr.vmem [resolvable:$true] %s19
      %22 = dma.hbm_to_vmem [thread:$0]  %s0, 128, %s20, [#allocation3]
    $region5: #{tpu_custom_call.1} parent=1 // pred_fallthru
      _
    // Predicated region
    $region6: #{tpu_custom_call.1} parent=1 // pred_check
      _
    $region7: #{tpu_custom_call.1} parent=1 // pred_check_branch
      %24 = sbr.rel (0) target = $region9
    $region8: #{tpu_custom_call.1} parent=1 // pred_region
      %s26 = ssub.s32 512, 512
      %27 = vsyncadd [#allocation6], %s26
      %s28 = sshll.u32 [#allocation5], 4
      %s29 = int_to_ptr.vmem [resolvable:$true] %s28
      %34 = dma.hbm_to_vmem [thread:$0]  %s1, 512, %s29, [#allocation6], 128, 128, 8
    $region9: #{tpu_custom_call.1} parent=1 // pred_fallthru
      _
    // Predicated region
    $region10: #{tpu_custom_call.1} parent=1 // pred_check
      _
    $region11: #{tpu_custom_call.1} parent=1 // pred_check_branch
      %36 = sbr.rel (0) target = $region13
    $region12: #{tpu_custom_call.1} parent=1 // pred_region
      _
    $region13: #{tpu_custom_call.1} parent=1 // pred_fallthru
      _
    // Predicated region
    $region14: #{tpu_custom_call.1} parent=1 // pred_check
      _
    $region15: #{tpu_custom_call.1} parent=1 // pred_check_branch
      %38 = sbr.rel (0) target = $region17
    $region16: #{tpu_custom_call.1} parent=1 // pred_region
      _
    $region17: #{tpu_custom_call.1} parent=1 // pred_fallthru
      _
    // Predicated region
    $region18: #{tpu_custom_call.1} parent=1 // pred_check
      _
    $region19: #{tpu_custom_call.1} parent=1 // pred_check_branch
      %40 = sbr.rel (0) target = $region21
    $region20: #{tpu_custom_call.1} parent=1 // pred_region
      _
    $region21: #{tpu_custom_call.1} parent=1 // pred_fallthru
      _
    // Predicated region
    $region22: #{tpu_custom_call.1} parent=1 // pred_check
      _
    $region23: #{tpu_custom_call.1} parent=1 // pred_check_branch
      %42 = sbr.rel (0) target = $region25
    $region24: #{tpu_custom_call.1} parent=1 // pred_region
      %43 = dma.done [#allocation3], 128
    $region25: #{tpu_custom_call.1} parent=1 // pred_fallthru
      _
    // Predicated region
    $region26: #{tpu_custom_call.1} parent=1 // pred_check
      _
    $region27: #{tpu_custom_call.1} parent=1 // pred_check_branch
      %45 = sbr.rel (0) target = $region29
    $region28: #{tpu_custom_call.1} parent=1 // pred_region
      %46 = dma.done [#allocation6], 512
    $region29: #{tpu_custom_call.1} parent=1 // pred_fallthru
      _
    %v47 = vld [vmem:[#allocation2] sm:$0xff]
    %v48 = vld [vmem:[#allocation5] sm:$0xff]
    %v49 = vld [vmem:[#allocation5 + $0x8] sm:$0xff]
    %v50 = vld [vmem:[#allocation5 + $0x10] sm:$0xff]
    %v51 = vld [vmem:[#allocation5 + $0x18] sm:$0xff]
    %v52 = vld [vmem:[%s2] sm:$0x1]
    %v54 = vlaneseq
    %v55 = vshrl.u32 %v54, 7
    %v56 = vsub.s32 0, %v55
    %v57 = vrot.slane %v52, %v56
    %vm59 = vcmask 261120
    %v61 = vsel %vm59, %v47, 0
    %63 = vmatprep.subr.mxu0 0.0
    %64 = vmatpush1.msra.mxu0 %v48
    %65 = vmatprep.subr.mxu0 0.0
    %66 = vmatpush1.msra.mxu0 %v49
    %67 = vmatprep.subr.mxu0 0.0
    %68 = vmatpush1.msra.mxu0 %v50
    %69 = vmatprep.subr.mxu0 0.0
    %70 = vmatpush1.msra.mxu0 %v51
    %71 = vmatprep.subr.mxu0 0.0
    %72 = vmatpush1.msra.mxu0 0.0
    %73 = vmatprep.subr.mxu0 0.0
    %74 = vmatpush1.msra.mxu0 0.0
    %75 = vmatprep.subr.mxu0 0.0
    %76 = vmatpush1.msra.mxu0 0.0
    %77 = vmatprep.subr.mxu0 0.0
    %78 = vmatpush1.msra.mxu0 0.0
    %79 = vmatprep.subr.mxu0 0.0
    %80 = vmatpush1.msra.mxu0 0.0
    %81 = vmatprep.subr.mxu0 0.0
    %82 = vmatpush1.msra.mxu0 0.0
    %83 = vmatprep.subr.mxu0 0.0
    %84 = vmatpush1.msra.mxu0 0.0
    %85 = vmatprep.subr.mxu0 0.0
    %86 = vmatpush1.msra.mxu0 0.0
    %87 = vmatprep.subr.mxu0 0.0
    %88 = vmatpush1.msra.mxu0 0.0
    %89 = vmatprep.subr.mxu0 0.0
    %90 = vmatpush1.msra.mxu0 0.0
    %91 = vmatprep.subr.mxu0 0.0
    %92 = vmatpush1.msra.mxu0 0.0
    %93 = vmatprep.subr.mxu0 0.0
    %94 = vmatpush1.msra.mxu0 0.0
    %95 = vmatprep.subr.mxu0 0.0
    %96 = vmatpush1.msra.mxu0 0.0
    %97 = vmatprep.subr.mxu0 0.0
    %98 = vmatpush1.msra.mxu0 0.0
    %99 = vmatprep.subr.mxu0 0.0
    %100 = vmatpush1.msra.mxu0 0.0
    %101 = vmatprep.subr.mxu0 0.0
    %102 = vmatpush1.msra.mxu0 0.0
    %103 = vmatprep.subr.mxu0 0.0
    %104 = vmatpush1.msra.mxu0 0.0
    %105 = vmatprep.subr.mxu0 0.0
    %106 = vmatpush1.msra.mxu0 0.0
    %107 = vmatprep.subr.mxu0 0.0
    %108 = vmatpush1.msra.mxu0 0.0
    %109 = vmatprep.subr.mxu0 0.0
    %110 = vmatpush1.msra.mxu0 0.0
    %111 = vmatprep.subr.mxu0 0.0
    %112 = vmatpush1.msra.mxu0 0.0
    %113 = vmatprep.subr.mxu0 0.0
    %114 = vmatpush1.msra.mxu0 0.0
    %115 = vmatprep.subr.mxu0 0.0
    %116 = vmatpush1.msra.mxu0 0.0
    %117 = vmatprep.subr.mxu0 0.0
    %118 = vmatpush1.msra.mxu0 0.0
    %119 = vmatprep.subr.mxu0 0.0
    %120 = vmatpush1.msra.mxu0 0.0
    %121 = vmatprep.subr.mxu0 0.0
    %122 = vmatpush1.msra.mxu0 0.0
    %123 = vmatprep.subr.mxu0 0.0
    %124 = vmatpush1.msra.mxu0 0.0
    %125 = vmatprep.subr.mxu0 0.0
    %126 = vmatpush1.msra.mxu0 0.0
    %127 = vmatprep.mubr.f32.mxu0 0.0
    %128 = vmatmul.mubr.f32.gmra.mrb[0].mxu0 %v61
    %v129 = vpop.f32.mrb[0].mxu0
    %v130 = vadd.f32 %v57, %v129
    %v131 = vpop.f32.mrb[0].mxu0
    %132 = vdwg.mxu0
    %v133 = vmax.f32 %v130, 0.0
    %v134 = vld [vmem:[%s3] sm:$0x3]
    %v135 = vld [vmem:[%s4] sm:$0x3]
    %137 = vset.pattern.permute.xlu0 0
    %138 = vperm.xlu0 %137, %v135
    %v139 = vpop.permute.xlu0 %138
    %141 = vmatprep.subr.mxu0 0.0
    %142 = vmatpush1.xpose.msra.mxu0 %v133
    %143 = vmatprep.subr.mxu0 0.0
    %144 = vmatpush1.xpose.msra.mxu0 0.0
    %145 = vmatprep.subr.mxu0 0.0
    %146 = vmatpush1.xpose.msra.mxu0 0.0
    %147 = vmatprep.subr.mxu0 0.0
    %148 = vmatpush1.xpose.msra.mxu0 0.0
    %149 = vmatprep.subr.mxu0 0.0
    %150 = vmatpush1.xpose.msra.mxu0 0.0
    %151 = vmatprep.subr.mxu0 0.0
    %152 = vmatpush1.xpose.msra.mxu0 0.0
    %153 = vmatprep.subr.mxu0 0.0
    %154 = vmatpush1.xpose.msra.mxu0 0.0
    %155 = vmatprep.subr.mxu0 0.0
    %156 = vmatpush1.xpose.msra.mxu0 0.0
    %157 = vmatprep.subr.mxu0 0.0
    %158 = vmatpush1.xpose.msra.mxu0 0.0
    %159 = vmatprep.subr.mxu0 0.0
    %160 = vmatpush1.xpose.msra.mxu0 0.0
    %161 = vmatprep.subr.mxu0 0.0
    %162 = vmatpush1.xpose.msra.mxu0 0.0
    %163 = vmatprep.subr.mxu0 0.0
    %164 = vmatpush1.xpose.msra.mxu0 0.0
    %165 = vmatprep.subr.mxu0 0.0
    %166 = vmatpush1.xpose.msra.mxu0 0.0
    %167 = vmatprep.subr.mxu0 0.0
    %168 = vmatpush1.xpose.msra.mxu0 0.0
    %169 = vmatprep.subr.mxu0 0.0
    %170 = vmatpush1.xpose.msra.mxu0 0.0
    %171 = vmatprep.subr.mxu0 0.0
    %172 = vmatpush1.xpose.msra.mxu0 0.0
    %173 = vmatprep.subr.mxu0 0.0
    %174 = vmatpush1.xpose.msra.mxu0 0.0
    %175 = vmatprep.subr.mxu0 0.0
    %176 = vmatpush1.xpose.msra.mxu0 0.0
    %177 = vmatprep.subr.mxu0 0.0
    %178 = vmatpush1.xpose.msra.mxu0 0.0
    %179 = vmatprep.subr.mxu0 0.0
    %180 = vmatpush1.xpose.msra.mxu0 0.0
    %181 = vmatprep.subr.mxu0 0.0
    %182 = vmatpush1.xpose.msra.mxu0 0.0
    %183 = vmatprep.subr.mxu0 0.0
    %184 = vmatpush1.xpose.msra.mxu0 0.0
    %185 = vmatprep.subr.mxu0 0.0
    %186 = vmatpush1.xpose.msra.mxu0 0.0
    %187 = vmatprep.subr.mxu0 0.0
    %188 = vmatpush1.xpose.msra.mxu0 0.0
    %189 = vmatprep.subr.mxu0 0.0
    %190 = vmatpush1.xpose.msra.mxu0 0.0
    %191 = vmatprep.subr.mxu0 0.0
    %192 = vmatpush1.xpose.msra.mxu0 0.0
    %193 = vmatprep.subr.mxu0 0.0
    %194 = vmatpush1.xpose.msra.mxu0 0.0
    %195 = vmatprep.subr.mxu0 0.0
    %196 = vmatpush1.xpose.msra.mxu0 0.0
    %197 = vmatprep.subr.mxu0 0.0
    %198 = vmatpush1.xpose.msra.mxu0 0.0
    %199 = vmatprep.subr.mxu0 0.0
    %200 = vmatpush1.xpose.msra.mxu0 0.0
    %201 = vmatprep.subr.mxu0 0.0
    %202 = vmatpush1.xpose.msra.mxu0 0.0
    %203 = vmatprep.subr.mxu0 0.0
    %204 = vmatpush1.xpose.msra.mxu0 0.0
    %205 = vmatprep.mubr.f32.mxu0 0.0
    %206 = vmatmul.mubr.f32.gmra.mrb[0].mxu0 %v134
    %v207 = vpop.f32.mrb[0].mxu0
    %v208 = vadd.f32 %v139, %v207
    %v209 = vpop.f32.mrb[0].mxu0
    %210 = vdwg.mxu0
    %vm211 = vcmask 57344
    %212 = vst.msk [vmem:[#allocation7] sm:$0x1] %vm211, %v208
    %v213 = vmul.f32 %v208, 1.442695
    %v214 = vpow.pop %v213
    %vm215 = vcmask 58369
    %216 = vst.msk [vmem:[#allocation7] sm:$0x2] %vm215, %v214
    // Predicated region
    $region30: #{tpu_custom_call.1} parent=1 // pred_check
      _
    $region31: #{tpu_custom_call.1} parent=1 // pred_check_branch
      %218 = sbr.rel (0) target = $region33
    $region32: #{tpu_custom_call.1} parent=1 // pred_region
      %s220 = ssub.s32 32, 32
      %221 = vsyncadd [#allocation4], %s220
      %s223 = sshll.u32 [#allocation7], 4
      %s224 = int_to_ptr.vmem [resolvable:$true] %s223
      %226 = dma.vmem_to_hbm [thread:$0]  %s224, 32, %s5, [#allocation4]
    $region33: #{tpu_custom_call.1} parent=1 // pred_fallthru
      _
    // Predicated region
    $region34: #{tpu_custom_call.1} parent=1 // pred_check
      _
    $region35: #{tpu_custom_call.1} parent=1 // pred_check_branch
      %228 = sbr.rel (0) target = $region37
    $region36: #{tpu_custom_call.1} parent=1 // pred_region
      %229 = dma.done [#allocation4], 32
    $region37: #{tpu_custom_call.1} parent=1 // pred_fallthru
      _
    %230 = vsyncpa [#allocation3], 1
    %231 = vsyncpa [#allocation6], 1
    %232 = vsyncpa [#allocation4], 1

</llo_original>
